<compile_context>
chip_gen: v7x
topology: tpu7x:2x2x1
jax: 0.10.0
libtpu: 0.0.40
codegen_flags: <defaults>
</compile_context>

<pallas_src>
import jax
import jax.numpy as jnp
from jax.experimental import pallas as pl
from jax.experimental.pallas import tpu as pltpu

LEAKY_SLOPE = 0.2   # nn.LeakyReLU(0.2) per the original module (not the 0.01 default)
LANE = 128
SUBLANE = 8


def _round_up(n, m):
    return ((n + m - 1) // m) * m


def decoder_kernel(x_ref, w1_ref, w2_ref, w3_ref, bias_ref, out_ref):
    """Fused Decoder MLP forward for one batch tile.

    x_ref:    (TB, latent)                 f32
    w1_ref:   (latent, hidden)             bf16 (VMEM-resident across the grid)
    w2_ref:   (hidden, hidden)             bf16
    w3_ref:   (hidden, out_pad)            bf16 (zero-padded columns beyond 784)
    bias_ref: (8, out_pad)                 f32  row0=b1, row1=b2, row2=b3 (zero-padded)
    out_ref:  (TB, out_pad)                f32  (lane-dense: out_pad % 128 == 0)
    """
    hidden = w1_ref.shape[1]

    def lrelu(v):
        return jnp.where(v >= 0, v, LEAKY_SLOPE * v)

    x = x_ref[...]                                   # f32 (TB, latent)
    b1 = bias_ref[0:1, :hidden]                      # (1, hidden)
    b2 = bias_ref[1:2, :hidden]                      # (1, hidden)
    b3 = bias_ref[2:3, :]                            # (1, out_pad)

    # fc_1 + LeakyReLU(0.2)  (bf16 weights widened in-register; f32 accumulate on MXU)
    w1 = w1_ref[...].astype(jnp.float32)
    h = jnp.dot(x, w1, preferred_element_type=jnp.float32) + b1
    h = lrelu(h)

    # fc_2 + LeakyReLU(0.2)
    w2 = w2_ref[...].astype(jnp.float32)
    h = jnp.dot(h, w2, preferred_element_type=jnp.float32) + b2
    h = lrelu(h)

    # fc_3 + sigmoid (exp on EUP, approx reciprocal on EUP -> VALU stays free)
    w3 = w3_ref[...].astype(jnp.float32)
    y = jnp.dot(h, w3, preferred_element_type=jnp.float32) + b3
    y = pl.reciprocal(1.0 + jnp.exp(-y), approx=True)

    out_ref[...] = y.astype(out_ref.dtype)


def pack_decoder_params(w1, b1, w2, b2, w3, b3):
    """Turn f32 (in, out) weights + biases into kernel-ready operands:
    bf16 weights, lane-padded w3, and one packed (8, out_pad) f32 bias buffer."""
    hidden = w1.shape[1]
    out_dim = w3.shape[1]
    out_pad = _round_up(out_dim, LANE)  # 784 -> 896 (7 * 128) => unmasked lane stores

    w3p = jnp.zeros((w3.shape[0], out_pad), jnp.float32).at[:, :out_dim].set(w3)

    bias = jnp.zeros((SUBLANE, out_pad), jnp.float32)
    bias = bias.at[0, :hidden].set(b1.reshape(-1))
    bias = bias.at[1, :hidden].set(b2.reshape(-1))
    bias = bias.at[2, :out_dim].set(b3.reshape(-1))

    return (w1.astype(jnp.bfloat16),
            w2.astype(jnp.bfloat16),
            w3p.astype(jnp.bfloat16),
            bias,
            out_dim)


def decoder_forward(x, packed, block_batch=512):
    """Run the fused Pallas kernel and reshape to NCHW (-1, 1, 28, 28)."""
    w1, w2, w3, bias, out_dim = packed
    B, latent = x.shape
    hidden = w1.shape[1]
    out_pad = w3.shape[1]

    # Batch tile: multiple of 8 sublanes, capped so the double-buffered out
    # tiles (2 x TB x out_pad x 4B ~ 3.6 MiB at TB=512) + tiny x tiles + ~60 KiB
    # of bf16 weights fit comfortably in scoped VMEM on every generation
    # (incl. v7x's 64 MiB physical / 32 MiB default scoped VMEM).
    TB = max(SUBLANE, min(block_batch, _round_up(B, SUBLANE)))
    B_pad = _round_up(B, TB)
    if B_pad != B:
        x = jnp.pad(x, ((0, B_pad - B), (0, 0)))

    grid = (B_pad // TB,)

    cost = pl.CostEstimate(
        flops=2 * B_pad * (latent * hidden + hidden * hidden + hidden * out_pad),
        transcendentals=B_pad * out_pad,
        bytes_accessed=(w1.size + w2.size + w3.size) * 2 + bias.size * 4
                       + B_pad * (latent + out_pad) * 4,
    )

    # Constant index_map => these operands are fetched once and stay VMEM-resident.
    resident = lambda a: pl.BlockSpec(a.shape, lambda i: (0,) * a.ndim)

    y = pl.pallas_call(
        decoder_kernel,
        out_shape=jax.ShapeDtypeStruct((B_pad, out_pad), jnp.float32),
        grid_spec=pltpu.PrefetchScalarGridSpec(
            num_scalar_prefetch=0,
            grid=grid,
            in_specs=[
                pl.BlockSpec((TB, latent), lambda i: (i, 0)),   # x: tiled over batch
                resident(w1), resident(w2), resident(w3), resident(bias),
            ],
            out_specs=pl.BlockSpec((TB, out_pad), lambda i: (i, 0)),
        ),
        compiler_params=pltpu.CompilerParams(
            dimension_semantics=("parallel",),       # shard batch tiles across TCs (v7x)
            vmem_limit_bytes=32 * 1024 * 1024,
        ),
        cost_estimate=cost,
    )(x, w1, w2, w3, bias)

    # Drop batch padding and the zero-padded output lanes, then match
    # torch: x_hat.view([-1, 1, 28, 28]).
    return y[:B, :out_dim].reshape(-1, 1, 28, 28)


def init_decoder_params(key, latent_dim, hidden_dim, output_dim):
    """PyTorch Linear-style init: U(-1/sqrt(fan_in), 1/sqrt(fan_in)) for W and b.
    Weights are stored as (in, out) = transpose of torch's Linear.weight."""
    keys = jax.random.split(key, 6)

    def linear(kw, kb, fan_in, fan_out):
        bound = 1.0 / jnp.sqrt(jnp.float32(fan_in))
        w = jax.random.uniform(kw, (fan_in, fan_out), jnp.float32, -bound, bound)
        b = jax.random.uniform(kb, (1, fan_out), jnp.float32, -bound, bound)
        return w, b

    w1, b1 = linear(keys[0], keys[1], latent_dim, hidden_dim)
    w2, b2 = linear(keys[2], keys[3], hidden_dim, hidden_dim)
    w3, b3 = linear(keys[4], keys[5], hidden_dim, output_dim)
    return (w1, b1, w2, b2, w3, b3)


def reference_forward(x, packed):
    """Pure-JAX reference using the same (bf16-stored) weights as the kernel."""
    w1, w2, w3, bias, out_dim = packed
    hidden = w1.shape[1]
    w1f = w1.astype(jnp.float32)
    w2f = w2.astype(jnp.float32)
    w3f = w3.astype(jnp.float32)
    b1 = bias[0, :hidden]
    b2 = bias[1, :hidden]
    b3 = bias[2, :]

    def lrelu(v):
        return jnp.where(v >= 0, v, LEAKY_SLOPE * v)

    h = lrelu(x @ w1f + b1)
    h = lrelu(h @ w2f + b2)
    y = jax.nn.sigmoid(h @ w3f + b3)
    return y[:, :out_dim].reshape(-1, 1, 28, 28)


if __name__ == "__main__":
    latent_dim, hidden_dim, output_dim = 8, 32, 28 * 28   # 784 -> view(-1, 1, 28, 28)
    batch = 2

    key = jax.random.PRNGKey(0)
    k_x, k_p = jax.random.split(key)

    x = jax.random.normal(k_x, (batch, latent_dim), dtype=jnp.float32)
    raw_params = init_decoder_params(k_p, latent_dim, hidden_dim, output_dim)
    packed = pack_decoder_params(*raw_params)

    x_hat = jax.block_until_ready(decoder_forward(x, packed))
    ref = jax.block_until_ready(reference_forward(x, packed))

    assert x_hat.shape == (batch, 1, 28, 28), x_hat.shape
    # Tolerance covers bf16 weight storage (shared with the reference), the
    # approx-EUP reciprocal in the kernel's sigmoid, and MXU f32 matmul precision.
    assert jnp.allclose(x_hat, ref, atol=2e-3, rtol=2e-3), "mismatch vs reference"

    print("KERNEL_OK")
</pallas_src>

<mosaic_0001>
module attributes {stable_mosaic.version = 11 : i64} {
  func.func @decoder_kernel(%arg0: i32, %arg1: memref<8x8xf32, #tpu.memory_space<vmem>>, %arg2: memref<8x32xbf16, #tpu.memory_space<vmem>>, %arg3: memref<32x32xbf16, #tpu.memory_space<vmem>>, %arg4: memref<32x896xbf16, #tpu.memory_space<vmem>>, %arg5: memref<8x896xf32, #tpu.memory_space<vmem>>, %arg6: memref<8x896xf32, #tpu.memory_space<vmem>>) attributes {dimension_semantics = [#tpu.dimension_semantics<parallel>], iteration_bounds = array<i64: 1>, scalar_prefetch = 0 : i64, scratch_operands = 0 : i64, tpu.core_type = #tpu.core_type<tc>, window_params = [{transform_indices = @transform_0, window_bounds = array<i64: 8, 8>}, {pipeline_mode = #tpu.pipeline_mode<synchronous>, transform_indices = @transform_1, window_bounds = array<i64: 8, 32>}, {pipeline_mode = #tpu.pipeline_mode<synchronous>, transform_indices = @transform_2, window_bounds = array<i64: 32, 32>}, {pipeline_mode = #tpu.pipeline_mode<synchronous>, transform_indices = @transform_3, window_bounds = array<i64: 32, 896>}, {pipeline_mode = #tpu.pipeline_mode<synchronous>, transform_indices = @transform_4, window_bounds = array<i64: 8, 896>}, {transform_indices = @transform_5, window_bounds = array<i64: 8, 896>}]} {
    %c0 = arith.constant 0 : index
    %c0_0 = arith.constant 0 : index
    %0 = vector.load %arg1[%c0, %c0_0] : memref<8x8xf32, #tpu.memory_space<vmem>>, vector<8x8xf32>
    %c0_1 = arith.constant 0 : index
    %c0_2 = arith.constant 0 : index
    %1 = vector.load %arg5[%c0_1, %c0_2] : memref<8x896xf32, #tpu.memory_space<vmem>>, vector<1x32xf32>
    %c1 = arith.constant 1 : index
    %c0_3 = arith.constant 0 : index
    %2 = vector.load %arg5[%c1, %c0_3] : memref<8x896xf32, #tpu.memory_space<vmem>>, vector<1x32xf32>
    %c2 = arith.constant 2 : index
    %c0_4 = arith.constant 0 : index
    %3 = vector.load %arg5[%c2, %c0_4] : memref<8x896xf32, #tpu.memory_space<vmem>>, vector<1x896xf32>
    %c0_5 = arith.constant 0 : index
    %c0_6 = arith.constant 0 : index
    %4 = vector.load %arg2[%c0_5, %c0_6] : memref<8x32xbf16, #tpu.memory_space<vmem>>, vector<8x32xbf16>
    %5 = arith.extf %4 : vector<8x32xbf16> to vector<8x32xf32>
    %cst = arith.constant dense<0.000000e+00> : vector<8x32xf32>
    %6 = tpu.matmul %0, %5, %cst {dimension_numbers = #tpu.dot_dimension_numbers<[1], [0], [0], [1], [0, 0, 1, 1], [], []>} : vector<8x8xf32>, vector<8x32xf32>, vector<8x32xf32> -> vector<8x32xf32>
    %7 = vector.broadcast %1 : vector<1x32xf32> to vector<8x32xf32>
    %8 = arith.addf %6, %7 : vector<8x32xf32>
    %cst_7 = arith.constant 0.000000e+00 : f32
    %9 = vector.broadcast %cst_7 : f32 to vector<8x32xf32>
    %10 = arith.cmpf oge, %8, %9 : vector<8x32xf32>
    %cst_8 = arith.constant 2.000000e-01 : f32
    %11 = vector.broadcast %cst_8 : f32 to vector<8x32xf32>
    %12 = arith.mulf %11, %8 : vector<8x32xf32>
    %13 = arith.select %10, %8, %12 : vector<8x32xi1>, vector<8x32xf32>
    %c0_9 = arith.constant 0 : index
    %c0_10 = arith.constant 0 : index
    %14 = vector.load %arg3[%c0_9, %c0_10] : memref<32x32xbf16, #tpu.memory_space<vmem>>, vector<32x32xbf16>
    %15 = arith.extf %14 : vector<32x32xbf16> to vector<32x32xf32>
    %cst_11 = arith.constant dense<0.000000e+00> : vector<8x32xf32>
    %16 = tpu.matmul %13, %15, %cst_11 {dimension_numbers = #tpu.dot_dimension_numbers<[1], [0], [0], [1], [0, 0, 1, 1], [], []>} : vector<8x32xf32>, vector<32x32xf32>, vector<8x32xf32> -> vector<8x32xf32>
    %17 = vector.broadcast %2 : vector<1x32xf32> to vector<8x32xf32>
    %18 = arith.addf %16, %17 : vector<8x32xf32>
    %cst_12 = arith.constant 0.000000e+00 : f32
    %19 = vector.broadcast %cst_12 : f32 to vector<8x32xf32>
    %20 = arith.cmpf oge, %18, %19 : vector<8x32xf32>
    %cst_13 = arith.constant 2.000000e-01 : f32
    %21 = vector.broadcast %cst_13 : f32 to vector<8x32xf32>
    %22 = arith.mulf %21, %18 : vector<8x32xf32>
    %23 = arith.select %20, %18, %22 : vector<8x32xi1>, vector<8x32xf32>
    %c0_14 = arith.constant 0 : index
    %c0_15 = arith.constant 0 : index
    %24 = vector.load %arg4[%c0_14, %c0_15] : memref<32x896xbf16, #tpu.memory_space<vmem>>, vector<32x896xbf16>
    %25 = arith.extf %24 : vector<32x896xbf16> to vector<32x896xf32>
    %cst_16 = arith.constant dense<0.000000e+00> : vector<8x896xf32>
    %26 = tpu.matmul %23, %25, %cst_16 {dimension_numbers = #tpu.dot_dimension_numbers<[1], [0], [0], [1], [0, 0, 1, 1], [], []>} : vector<8x32xf32>, vector<32x896xf32>, vector<8x896xf32> -> vector<8x896xf32>
    %27 = vector.broadcast %3 : vector<1x896xf32> to vector<8x896xf32>
    %28 = arith.addf %26, %27 : vector<8x896xf32>
    %cst_17 = arith.constant 0.000000e+00 : f32
    %29 = vector.broadcast %cst_17 : f32 to vector<8x896xf32>
    %30 = arith.subf %29, %28 : vector<8x896xf32>
    %31 = math.exp %30 : vector<8x896xf32>
    %cst_18 = arith.constant 1.000000e+00 : f32
    %32 = vector.broadcast %cst_18 : f32 to vector<8x896xf32>
    %33 = arith.addf %32, %31 : vector<8x896xf32>
    %34 = tpu.reciprocal %33 {approx = true} : vector<8x896xf32> -> vector<8x896xf32>
    %c0_19 = arith.constant 0 : index
    %c0_20 = arith.constant 0 : index
    %35 = vector.load %arg6[%c0_19, %c0_20] : memref<8x896xf32, #tpu.memory_space<vmem>>, vector<8x896xf32>
    tpu.vector_store %arg6[%c0_19, %c0_20], %34 {strides = array<i32>} : memref<8x896xf32, #tpu.memory_space<vmem>>, vector<8x896xf32>,
    return
  }
  func.func @transform_0(%arg0: i32) -> (i32, i32) {
    %c0_i32 = arith.constant 0 : i32
    %c0_i32_0 = arith.constant 0 : i32
    return %arg0, %c0_i32 : i32, i32
  }
  func.func @transform_1(%arg0: i32) -> (i32, i32) {
    %c0_i32 = arith.constant 0 : i32
    %c0_i32_0 = arith.constant 0 : i32
    %c0_i32_1 = arith.constant 0 : i32
    return %c0_i32, %c0_i32_0 : i32, i32
  }
  func.func @transform_2(%arg0: i32) -> (i32, i32) {
    %c0_i32 = arith.constant 0 : i32
    %c0_i32_0 = arith.constant 0 : i32
    %c0_i32_1 = arith.constant 0 : i32
    return %c0_i32, %c0_i32_0 : i32, i32
  }
  func.func @transform_3(%arg0: i32) -> (i32, i32) {
    %c0_i32 = arith.constant 0 : i32
    %c0_i32_0 = arith.constant 0 : i32
    %c0_i32_1 = arith.constant 0 : i32
    return %c0_i32, %c0_i32_0 : i32, i32
  }
  func.func @transform_4(%arg0: i32) -> (i32, i32) {
    %c0_i32 = arith.constant 0 : i32
    %c0_i32_0 = arith.constant 0 : i32
    %c0_i32_1 = arith.constant 0 : i32
    return %c0_i32, %c0_i32_0 : i32, i32
  }
  func.func @transform_5(%arg0: i32) -> (i32, i32) {
    %c0_i32 = arith.constant 0 : i32
    %c0_i32_0 = arith.constant 0 : i32
    return %arg0, %c0_i32 : i32, i32
  }
}

</mosaic_0001>

<llo_original>
// kernel: tpu_custom_call.1
$region0: #{tpu_custom_call.1}
  #allocation0 [shape = 'u32[]', space=smem, size = 0x4, offset = 0x4, fixed_abs, tag = 'smem constant byte address 0x4 - core index']
  #allocation1 [shape = 'u32[144,128]{1,0:T(1,128)}', space=vmem, size = 0x12000, scoped, tag = 'internal scratch']
  %s0 = inlined_call_operand.hbm [shape: f32[8,8], index: 0, kind: input, shape index: {}]
  %s1 = inlined_call_operand.hbm [shape: bf16[8,32], index: 1, kind: input, shape index: {}]
  %s2 = inlined_call_operand.hbm [shape: bf16[32,32], index: 2, kind: input, shape index: {}]
  %s3 = inlined_call_operand.hbm [shape: bf16[32,896], index: 3, kind: input, shape index: {}]
  %s4 = inlined_call_operand.hbm [shape: f32[8,896], index: 4, kind: input, shape index: {}]
  %s5 = inlined_call_operand.hbm [shape: f32[8,896], index: 5, kind: output, shape index: {}]
  %s6 = sld [smem:[#allocation0]]
  $region50: #{tpu_custom_call.1} parent=0
    _
  %s8 = ssub.s32 1, %s6
  %s9 = scalar_select 0, %s8, %s6
  $region1: #{tpu_custom_call.1} parent=0
    #allocation2 [shape = 'u8[4096]{0}', space=vmem, size = 0x1000, scoped, tag = 'input window, operand 0, single buffered']
    #allocation3 [shape = 's32[1]{0}', space=sflag, size = 0x4, scoped, tag = 'scoped memory for tpu_custom_call.1']
    #allocation4 [shape = 's32[1]{0}', space=sflag, size = 0x4, scoped, tag = 'scoped memory for tpu_custom_call.1']
    #allocation5 [shape = 'u8[2048]{0}', space=vmem, size = 0x800, scoped, tag = 'input window, operand 1, single buffered']
    #allocation6 [shape = 's32[1]{0}', space=sflag, size = 0x4, scoped, tag = 'scoped memory for tpu_custom_call.1']
    #allocation7 [shape = 'u8[8192]{0}', space=vmem, size = 0x2000, scoped, tag = 'input window, operand 2, single buffered']
    #allocation8 [shape = 'u8[57344]{0}', space=vmem, size = 0xe000, scoped, tag = 'input window, operand 3, single buffered']
    #allocation9 [shape = 's32[1]{0}', space=sflag, size = 0x4, scoped, tag = 'scoped memory for tpu_custom_call.1']
    #allocation10 [shape = 'u8[28672]{0}', space=vmem, size = 0x7000, scoped, tag = 'input window, operand 4, single buffered']
    #allocation11 [shape = 'u8[28672]{0}', space=vmem, size = 0x7000, scoped, tag = 'output window, operand 0, single buffered']
    %10 = vsyncpa [#allocation3], 0
    %11 = vsyncpa [#allocation6], 0
    %12 = vsyncpa [#allocation9], 0
    %13 = vsyncpa [#allocation4], 0
    // Predicated region
    $region2: #{tpu_custom_call.1} parent=1 // pred_check
      _
    $region3: #{tpu_custom_call.1} parent=1 // pred_check_branch
      %15 = sbr.rel (0) target = $region5
    $region4: #{tpu_custom_call.1} parent=1 // pred_region
      %s17 = ssub.s32 128, 128
      %18 = vsyncadd [#allocation3], %s17
      %s20 = sshll.u32 [#allocation2], 4
      %s21 = int_to_ptr.vmem [resolvable:$true] %s20
      %23 = dma.hbm_to_vmem [thread:$0]  %s0, 128, %s21, [#allocation3]
    $region5: #{tpu_custom_call.1} parent=1 // pred_fallthru
      _
    // Predicated region
    $region6: #{tpu_custom_call.1} parent=1 // pred_check
      _
    $region7: #{tpu_custom_call.1} parent=1 // pred_check_branch
      %25 = sbr.rel (0) target = $region9
    $region8: #{tpu_custom_call.1} parent=1 // pred_region
      %s27 = ssub.s32 64, 64
      %28 = vsyncadd [#allocation6], %s27
      %s30 = sshll.u32 [#allocation5], 4
      %s31 = int_to_ptr.vmem [resolvable:$true] %s30
      %33 = dma.hbm_to_vmem [thread:$0]  %s1, 64, %s31, [#allocation6]
    $region9: #{tpu_custom_call.1} parent=1 // pred_fallthru
      _
    // Predicated region
    $region10: #{tpu_custom_call.1} parent=1 // pred_check
      _
    $region11: #{tpu_custom_call.1} parent=1 // pred_check_branch
      %35 = sbr.rel (0) target = $region13
    $region12: #{tpu_custom_call.1} parent=1 // pred_region
      %s37 = ssub.s32 256, 256
      %38 = vsyncadd [#allocation6], %s37
      %s39 = sshll.u32 [#allocation7], 4
      %s40 = int_to_ptr.vmem [resolvable:$true] %s39
      %45 = dma.hbm_to_vmem [thread:$0]  %s2, 256, %s40, [#allocation6], 64, 64, 4
    $region13: #{tpu_custom_call.1} parent=1 // pred_fallthru
      _
    // Predicated region
    $region14: #{tpu_custom_call.1} parent=1 // pred_check
      _
    $region15: #{tpu_custom_call.1} parent=1 // pred_check_branch
      %47 = sbr.rel (0) target = $region17
    $region16: #{tpu_custom_call.1} parent=1 // pred_region
      %s49 = ssub.s32 1792, 1792
      %50 = vsyncadd [#allocation9], %s49
      %s51 = sshll.u32 [#allocation8], 4
      %s52 = int_to_ptr.vmem [resolvable:$true] %s51
      %57 = dma.hbm_to_vmem [thread:$0]  %s3, 1792, %s52, [#allocation9], 448, 448, 28
    $region17: #{tpu_custom_call.1} parent=1 // pred_fallthru
      _
    // Predicated region
    $region18: #{tpu_custom_call.1} parent=1 // pred_check
      _
    $region19: #{tpu_custom_call.1} parent=1 // pred_check_branch
      %59 = sbr.rel (0) target = $region21
    $region20: #{tpu_custom_call.1} parent=1 // pred_region
      %s61 = ssub.s32 896, 896
      %62 = vsyncadd [#allocation9], %s61
      %s64 = sshll.u32 [#allocation10], 4
      %s65 = int_to_ptr.vmem [resolvable:$true] %s64
      %67 = dma.hbm_to_vmem [thread:$0]  %s4, 896, %s65, [#allocation9]
    $region21: #{tpu_custom_call.1} parent=1 // pred_fallthru
      _
    // Predicated region
    $region22: #{tpu_custom_call.1} parent=1 // pred_check
      _
    $region23: #{tpu_custom_call.1} parent=1 // pred_check_branch
      %69 = sbr.rel (0) target = $region25
    $region24: #{tpu_custom_call.1} parent=1 // pred_region
      %70 = dma.done [#allocation3], 128
    $region25: #{tpu_custom_call.1} parent=1 // pred_fallthru
      _
    // Predicated region
    $region26: #{tpu_custom_call.1} parent=1 // pred_check
      _
    $region27: #{tpu_custom_call.1} parent=1 // pred_check_branch
      %72 = sbr.rel (0) target = $region29
    $region28: #{tpu_custom_call.1} parent=1 // pred_region
      %73 = dma.done [#allocation6], 64
    $region29: #{tpu_custom_call.1} parent=1 // pred_fallthru
      _
    // Predicated region
    $region30: #{tpu_custom_call.1} parent=1 // pred_check
      _
    $region31: #{tpu_custom_call.1} parent=1 // pred_check_branch
      %75 = sbr.rel (0) target = $region33
    $region32: #{tpu_custom_call.1} parent=1 // pred_region
      %76 = dma.done [#allocation6], 256
    $region33: #{tpu_custom_call.1} parent=1 // pred_fallthru
      _
    // Predicated region
    $region34: #{tpu_custom_call.1} parent=1 // pred_check
      _
    $region35: #{tpu_custom_call.1} parent=1 // pred_check_branch
      %78 = sbr.rel (0) target = $region37
    $region36: #{tpu_custom_call.1} parent=1 // pred_region
      %79 = dma.done [#allocation9], 1792
    $region37: #{tpu_custom_call.1} parent=1 // pred_fallthru
      _
    // Predicated region
    $region38: #{tpu_custom_call.1} parent=1 // pred_check
      _
    $region39: #{tpu_custom_call.1} parent=1 // pred_check_branch
      %81 = sbr.rel (0) target = $region41
    $region40: #{tpu_custom_call.1} parent=1 // pred_region
      %82 = dma.done [#allocation9], 896
    $region41: #{tpu_custom_call.1} parent=1 // pred_fallthru
      _
    %v83 = vld [vmem:[#allocation2] sm:$0xff]
    %v84 = vld [vmem:[#allocation10] ss:$0 sm:$0xff]
    %v85 = vld [vmem:[#allocation10 + $0x1] ss:$0 sm:$0xff]
    %s86 = scalar_lea.vmem [#allocation10], 2
    %v87 = vld [vmem:[%s86] ss:$8 sm:$0xf]
    %v88 = vld [vmem:[%s86] ss:$8 sm:$0xf0]
    %v89 = vor.u32 %v87, %v88
    %v90 = vld [vmem:[#allocation5] sm:$0xf]
    %v91 = vunpack.c.l.bf16 %v90
    %vm92 = vcmask 64512
    %v94 = vsel %vm92, %v83, 0
    %96 = vmatprep.subr.mxu0 0.0
    %97 = vmatpush1.msra.mxu0 %v91
    %98 = vmatprep.subr.mxu0 0.0
    %99 = vmatpush1.msra.mxu0 0.0
    %100 = vmatprep.subr.mxu0 0.0
    %101 = vmatpush1.msra.mxu0 0.0
    %102 = vmatprep.subr.mxu0 0.0
    %103 = vmatpush1.msra.mxu0 0.0
    %104 = vmatprep.subr.mxu0 0.0
    %105 = vmatpush1.msra.mxu0 0.0
    %106 = vmatprep.subr.mxu0 0.0
    %107 = vmatpush1.msra.mxu0 0.0
    %108 = vmatprep.subr.mxu0 0.0
    %109 = vmatpush1.msra.mxu0 0.0
    %110 = vmatprep.subr.mxu0 0.0
    %111 = vmatpush1.msra.mxu0 0.0
    %112 = vmatprep.subr.mxu0 0.0
    %113 = vmatpush1.msra.mxu0 0.0
    %114 = vmatprep.subr.mxu0 0.0
    %115 = vmatpush1.msra.mxu0 0.0
    %116 = vmatprep.subr.mxu0 0.0
    %117 = vmatpush1.msra.mxu0 0.0
    %118 = vmatprep.subr.mxu0 0.0
    %119 = vmatpush1.msra.mxu0 0.0
    %120 = vmatprep.subr.mxu0 0.0
    %121 = vmatpush1.msra.mxu0 0.0
    %122 = vmatprep.subr.mxu0 0.0
    %123 = vmatpush1.msra.mxu0 0.0
    %124 = vmatprep.subr.mxu0 0.0
    %125 = vmatpush1.msra.mxu0 0.0
    %126 = vmatprep.subr.mxu0 0.0
    %127 = vmatpush1.msra.mxu0 0.0
    %128 = vmatprep.subr.mxu0 0.0
    %129 = vmatpush1.msra.mxu0 0.0
    %130 = vmatprep.subr.mxu0 0.0
    %131 = vmatpush1.msra.mxu0 0.0
    %132 = vmatprep.subr.mxu0 0.0
    %133 = vmatpush1.msra.mxu0 0.0
    %134 = vmatprep.subr.mxu0 0.0
    %135 = vmatpush1.msra.mxu0 0.0
    %136 = vmatprep.subr.mxu0 0.0
    %137 = vmatpush1.msra.mxu0 0.0
    %138 = vmatprep.subr.mxu0 0.0
    %139 = vmatpush1.msra.mxu0 0.0
    %140 = vmatprep.subr.mxu0 0.0
    %141 = vmatpush1.msra.mxu0 0.0
    %142 = vmatprep.subr.mxu0 0.0
    %143 = vmatpush1.msra.mxu0 0.0
    %144 = vmatprep.subr.mxu0 0.0
    %145 = vmatpush1.msra.mxu0 0.0
    %146 = vmatprep.subr.mxu0 0.0
    %147 = vmatpush1.msra.mxu0 0.0
    %148 = vmatprep.subr.mxu0 0.0
    %149 = vmatpush1.msra.mxu0 0.0
    %150 = vmatprep.subr.mxu0 0.0
    %151 = vmatpush1.msra.mxu0 0.0
    %152 = vmatprep.subr.mxu0 0.0
    %153 = vmatpush1.msra.mxu0 0.0
    %154 = vmatprep.subr.mxu0 0.0
    %155 = vmatpush1.msra.mxu0 0.0
    %156 = vmatprep.subr.mxu0 0.0
    %157 = vmatpush1.msra.mxu0 0.0
    %158 = vmatprep.subr.mxu0 0.0
    %159 = vmatpush1.msra.mxu0 0.0
    %160 = vmatprep.mubr.f32.mxu0 0.0
    %161 = vmatmul.mubr.f32.gmra.mrb[0].mxu0 %v94
    %v162 = vpop.f32.mrb[0].mxu0
    %v163 = vadd.f32 %v84, %v162
    %v164 = vpop.f32.mrb[0].mxu0
    %165 = vdwg.mxu0
    %vm166 = vcmp.ge.f32.partialorder %v163, 0.0
    %v167 = vmul.f32 %v163, 0.2
    %v168 = vsel %vm166, %v163, %v167
    %v169 = vld [vmem:[#allocation7] sm:$0xf]
    %v170 = vld [vmem:[#allocation7 + $0x4] sm:$0xf]
    %v171 = vld [vmem:[#allocation7 + $0x8] sm:$0xf]
    %v172 = vld [vmem:[#allocation7 + $0xc] sm:$0xf]
    %v173 = vunpack.c.l.bf16 %v169
    %v174 = vunpack.c.l.bf16 %v170
    %v175 = vunpack.c.l.bf16 %v171
    %v176 = vunpack.c.l.bf16 %v172
    %vm177 = vcmask 261120
    %v179 = vsel %vm177, %v168, 0
    %181 = vmatprep.subr.mxu0 0.0
    %182 = vmatpush1.msra.mxu0 %v173
    %183 = vmatprep.subr.mxu0 0.0
    %184 = vmatpush1.msra.mxu0 %v174
    %185 = vmatprep.subr.mxu0 0.0
    %186 = vmatpush1.msra.mxu0 %v175
    %187 = vmatprep.subr.mxu0 0.0
    %188 = vmatpush1.msra.mxu0 %v176
    %189 = vmatprep.subr.mxu0 0.0
    %190 = vmatpush1.msra.mxu0 0.0
    %191 = vmatprep.subr.mxu0 0.0
    %192 = vmatpush1.msra.mxu0 0.0
    %193 = vmatprep.subr.mxu0 0.0
    %194 = vmatpush1.msra.mxu0 0.0
    %195 = vmatprep.subr.mxu0 0.0
    %196 = vmatpush1.msra.mxu0 0.0
    %197 = vmatprep.subr.mxu0 0.0
    %198 = vmatpush1.msra.mxu0 0.0
    %199 = vmatprep.subr.mxu0 0.0
    %200 = vmatpush1.msra.mxu0 0.0
    %201 = vmatprep.subr.mxu0 0.0
    %202 = vmatpush1.msra.mxu0 0.0
    %203 = vmatprep.subr.mxu0 0.0
    %204 = vmatpush1.msra.mxu0 0.0
    %205 = vmatprep.subr.mxu0 0.0
    %206 = vmatpush1.msra.mxu0 0.0
    %207 = vmatprep.subr.mxu0 0.0
    %208 = vmatpush1.msra.mxu0 0.0
    %209 = vmatprep.subr.mxu0 0.0
    %210 = vmatpush1.msra.mxu0 0.0
    %211 = vmatprep.subr.mxu0 0.0
    %212 = vmatpush1.msra.mxu0 0.0
    %213 = vmatprep.subr.mxu0 0.0
    %214 = vmatpush1.msra.mxu0 0.0
    %215 = vmatprep.subr.mxu0 0.0
    %216 = vmatpush1.msra.mxu0 0.0
    %217 = vmatprep.subr.mxu0 0.0
    %218 = vmatpush1.msra.mxu0 0.0
    %219 = vmatprep.subr.mxu0 0.0
    %220 = vmatpush1.msra.mxu0 0.0
    %221 = vmatprep.subr.mxu0 0.0
    %222 = vmatpush1.msra.mxu0 0.0
    %223 = vmatprep.subr.mxu0 0.0
    %224 = vmatpush1.msra.mxu0 0.0
    %225 = vmatprep.subr.mxu0 0.0
    %226 = vmatpush1.msra.mxu0 0.0
    %227 = vmatprep.subr.mxu0 0.0
    %228 = vmatpush1.msra.mxu0 0.0
    %229 = vmatprep.subr.mxu0 0.0
    %230 = vmatpush1.msra.mxu0 0.0
    %231 = vmatprep.subr.mxu0 0.0
    %232 = vmatpush1.msra.mxu0 0.0
    %233 = vmatprep.subr.mxu0 0.0
    %234 = vmatpush1.msra.mxu0 0.0
    %235 = vmatprep.subr.mxu0 0.0
    %236 = vmatpush1.msra.mxu0 0.0
    %237 = vmatprep.subr.mxu0 0.0
    %238 = vmatpush1.msra.mxu0 0.0
    %239 = vmatprep.subr.mxu0 0.0
    %240 = vmatpush1.msra.mxu0 0.0
    %241 = vmatprep.subr.mxu0 0.0
    %242 = vmatpush1.msra.mxu0 0.0
    %243 = vmatprep.subr.mxu0 0.0
    %244 = vmatpush1.msra.mxu0 0.0
    %245 = vmatprep.mubr.f32.mxu0 0.0
    %246 = vmatmul.mubr.f32.gmra.mrb[0].mxu0 %v179
    %v247 = vpop.f32.mrb[0].mxu0
    %v248 = vadd.f32 %v85, %v247
    %v249 = vpop.f32.mrb[0].mxu0
    %250 = vdwg.mxu0
    %vm251 = vcmp.ge.f32.partialorder %v248, 0.0
    %v252 = vmul.f32 %v248, 0.2
    %v253 = vsel %vm251, %v248, %v252
    %v254 = vld [vmem:[#allocation8] sm:$0xff]
    %v255 = vld [vmem:[#allocation8 + $0x8] sm:$0xff]
    %v256 = vld [vmem:[#allocation8 + $0x10] sm:$0xff]
    %v257 = vld [vmem:[#allocation8 + $0x18] sm:$0xf]
    %v258 = vld [vmem:[#allocation8 + $0x1c] sm:$0xff]
    %v259 = vld [vmem:[#allocation8 + $0x24] sm:$0xff]
    %v260 = vld [vmem:[#allocation8 + $0x2c] sm:$0xff]
    %v261 = vld [vmem:[#allocation8 + $0x34] sm:$0xf]
    %v262 = vld [vmem:[#allocation8 + $0x38] sm:$0xff]
    %v263 = vld [vmem:[#allocation8 + $0x40] sm:$0xff]
    %v264 = vld [vmem:[#allocation8 + $0x48] sm:$0xff]
    %v265 = vld [vmem:[#allocation8 + $0x50] sm:$0xf]
    %v266 = vld [vmem:[#allocation8 + $0x54] sm:$0xff]
    %v267 = vld [vmem:[#allocation8 + $0x5c] sm:$0xff]
    %v268 = vld [vmem:[#allocation8 + $0x64] sm:$0xff]
    %v269 = vld [vmem:[#allocation8 + $0x6c] sm:$0xf]
    %v270 = vunpack.c.l.bf16 %v254
    %v271 = vunpack.c.h.bf16 %v254
    %v272 = vunpack.c.l.bf16 %v255
    %v273 = vunpack.c.h.bf16 %v255
    %v274 = vunpack.c.l.bf16 %v256
    %v275 = vunpack.c.h.bf16 %v256
    %v276 = vunpack.c.l.bf16 %v257
    %v277 = vunpack.c.l.bf16 %v258
    %v278 = vunpack.c.h.bf16 %v258
    %v279 = vunpack.c.l.bf16 %v259
    %v280 = vunpack.c.h.bf16 %v259
    %v281 = vunpack.c.l.bf16 %v260
    %v282 = vunpack.c.h.bf16 %v260
    %v283 = vunpack.c.l.bf16 %v261
    %v284 = vunpack.c.l.bf16 %v262
    %v285 = vunpack.c.h.bf16 %v262
    %v286 = vunpack.c.l.bf16 %v263
    %v287 = vunpack.c.h.bf16 %v263
    %v288 = vunpack.c.l.bf16 %v264
    %v289 = vunpack.c.h.bf16 %v264
    %v290 = vunpack.c.l.bf16 %v265
    %v291 = vunpack.c.l.bf16 %v266
    %v292 = vunpack.c.h.bf16 %v266
    %v293 = vunpack.c.l.bf16 %v267
    %v294 = vunpack.c.h.bf16 %v267
    %v295 = vunpack.c.l.bf16 %v268
    %v296 = vunpack.c.h.bf16 %v268
    %v297 = vunpack.c.l.bf16 %v269
    %v299 = vlaneseq
    %v300 = vshrl.u32 %v299, 7
    %v301 = vsub.s32 0, %v300
    %v302 = vrot.slane %v89, %v301
    %v303 = vlaneseq
    %v304 = vshrl.u32 %v303, 7
    %v305 = vsub.s32 1, %v304
    %v306 = vrot.slane %v89, %v305
    %v307 = vlaneseq
    %v308 = vshrl.u32 %v307, 7
    %v309 = vsub.s32 2, %v308
    %v310 = vrot.slane %v89, %v309
    %v311 = vlaneseq
    %v312 = vshrl.u32 %v311, 7
    %v313 = vsub.s32 3, %v312
    %v314 = vrot.slane %v89, %v313
    %v315 = vlaneseq
    %v316 = vshrl.u32 %v315, 7
    %v317 = vsub.s32 4, %v316
    %v318 = vrot.slane %v89, %v317
    %v319 = vlaneseq
    %v320 = vshrl.u32 %v319, 7
    %v321 = vsub.s32 5, %v320
    %v322 = vrot.slane %v89, %v321
    %v323 = vlaneseq
    %v324 = vshrl.u32 %v323, 7
    %v325 = vsub.s32 6, %v324
    %v326 = vrot.slane %v89, %v325
    %v335 = vsel %vm177, %v253, 0
    %337 = vmatprep.subr.mxu0 %v271
    %338 = vmatpush1.msra.mxu0 %v270
    %339 = vmatprep.subr.mxu0 %v278
    %340 = vmatpush1.msra.mxu0 %v277
    %341 = vmatprep.subr.mxu0 %v285
    %342 = vmatpush1.msra.mxu0 %v284
    %343 = vmatprep.subr.mxu0 %v292
    %344 = vmatpush1.msra.mxu0 %v291
    %345 = vmatprep.subr.mxu0 0.0
    %346 = vmatpush1.msra.mxu0 0.0
    %347 = vmatprep.subr.mxu0 0.0
    %348 = vmatpush1.msra.mxu0 0.0
    %349 = vmatprep.subr.mxu0 0.0
    %350 = vmatpush1.msra.mxu0 0.0
    %351 = vmatprep.subr.mxu0 0.0
    %352 = vmatpush1.msra.mxu0 0.0
    %353 = vmatprep.subr.mxu0 0.0
    %354 = vmatpush1.msra.mxu0 0.0
    %355 = vmatprep.subr.mxu0 0.0
    %356 = vmatpush1.msra.mxu0 0.0
    %357 = vmatprep.subr.mxu0 0.0
    %358 = vmatpush1.msra.mxu0 0.0
    %359 = vmatprep.subr.mxu0 0.0
    %360 = vmatpush1.msra.mxu0 0.0
    %361 = vmatprep.subr.mxu0 0.0
    %362 = vmatpush1.msra.mxu0 0.0
    %363 = vmatprep.subr.mxu0 0.0
    %364 = vmatpush1.msra.mxu0 0.0
    %365 = vmatprep.subr.mxu0 0.0
    %366 = vmatpush1.msra.mxu0 0.0
    %367 = vmatprep.subr.mxu0 0.0
    %368 = vmatpush1.msra.mxu0 0.0
    %369 = vmatprep.subr.mxu0 0.0
    %370 = vmatpush1.msra.mxu0 0.0
    %371 = vmatprep.subr.mxu0 0.0
    %372 = vmatpush1.msra.mxu0 0.0
    %373 = vmatprep.subr.mxu0 0.0
    %374 = vmatpush1.msra.mxu0 0.0
    %375 = vmatprep.subr.mxu0 0.0
    %376 = vmatpush1.msra.mxu0 0.0
    %377 = vmatprep.subr.mxu0 0.0
    %378 = vmatpush1.msra.mxu0 0.0
    %379 = vmatprep.subr.mxu0 0.0
    %380 = vmatpush1.msra.mxu0 0.0
    %381 = vmatprep.subr.mxu0 0.0
    %382 = vmatpush1.msra.mxu0 0.0
    %383 = vmatprep.subr.mxu0 0.0
    %384 = vmatpush1.msra.mxu0 0.0
    %385 = vmatprep.subr.mxu0 0.0
    %386 = vmatpush1.msra.mxu0 0.0
    %387 = vmatprep.subr.mxu0 0.0
    %388 = vmatpush1.msra.mxu0 0.0
    %389 = vmatprep.subr.mxu0 0.0
    %390 = vmatpush1.msra.mxu0 0.0
    %391 = vmatprep.subr.mxu0 0.0
    %392 = vmatpush1.msra.mxu0 0.0
    %393 = vmatprep.subr.mxu0 0.0
    %394 = vmatpush1.msra.mxu0 0.0
    %395 = vmatprep.subr.mxu0 0.0
    %396 = vmatpush1.msra.mxu0 0.0
    %397 = vmatprep.subr.mxu0 0.0
    %398 = vmatpush1.msra.mxu0 0.0
    %399 = vmatprep.subr.mxu0 0.0
    %400 = vmatpush1.msra.mxu0 0.0
    %401 = vmatprep.mubr.f32.mxu0 0.0
    %402 = vmatmul.mubr.f32.gmra.mrb[0].mxu0 %v335
    %v403 = vpop.f32.mrb[0].mxu0
    %v404 = vadd.f32 %v302, %v403
    %v405 = vpop.f32.mrb[0].mxu0
    %v406 = vadd.f32 %v306, %v405
    %407 = vdwg.mxu0
    %408 = vmatprep.subr.mxu0 %v273
    %409 = vmatpush1.msra.mxu0 %v272
    %410 = vmatprep.subr.mxu0 %v280
    %411 = vmatpush1.msra.mxu0 %v279
    %412 = vmatprep.subr.mxu0 %v287
    %413 = vmatpush1.msra.mxu0 %v286
    %414 = vmatprep.subr.mxu0 %v294
    %415 = vmatpush1.msra.mxu0 %v293
    %416 = vmatprep.subr.mxu0 0.0
    %417 = vmatpush1.msra.mxu0 0.0
    %418 = vmatprep.subr.mxu0 0.0
    %419 = vmatpush1.msra.mxu0 0.0
    %420 = vmatprep.subr.mxu0 0.0
    %421 = vmatpush1.msra.mxu0 0.0
    %422 = vmatprep.subr.mxu0 0.0
    %423 = vmatpush1.msra.mxu0 0.0
    %424 = vmatprep.subr.mxu0 0.0
    %425 = vmatpush1.msra.mxu0 0.0
    %426 = vmatprep.subr.mxu0 0.0
    %427 = vmatpush1.msra.mxu0 0.0
    %428 = vmatprep.subr.mxu0 0.0
    %429 = vmatpush1.msra.mxu0 0.0
    %430 = vmatprep.subr.mxu0 0.0
    %431 = vmatpush1.msra.mxu0 0.0
    %432 = vmatprep.subr.mxu0 0.0
    %433 = vmatpush1.msra.mxu0 0.0
    %434 = vmatprep.subr.mxu0 0.0
    %435 = vmatpush1.msra.mxu0 0.0
    %436 = vmatprep.subr.mxu0 0.0
    %437 = vmatpush1.msra.mxu0 0.0
    %438 = vmatprep.subr.mxu0 0.0
    %439 = vmatpush1.msra.mxu0 0.0
    %440 = vmatprep.subr.mxu0 0.0
    %441 = vmatpush1.msra.mxu0 0.0
    %442 = vmatprep.subr.mxu0 0.0
    %443 = vmatpush1.msra.mxu0 0.0
    %444 = vmatprep.subr.mxu0 0.0
    %445 = vmatpush1.msra.mxu0 0.0
    %446 = vmatprep.subr.mxu0 0.0
    %447 = vmatpush1.msra.mxu0 0.0
    %448 = vmatprep.subr.mxu0 0.0
    %449 = vmatpush1.msra.mxu0 0.0
    %450 = vmatprep.subr.mxu0 0.0
    %451 = vmatpush1.msra.mxu0 0.0
    %452 = vmatprep.subr.mxu0 0.0
    %453 = vmatpush1.msra.mxu0 0.0
    %454 = vmatprep.subr.mxu0 0.0
    %455 = vmatpush1.msra.mxu0 0.0
    %456 = vmatprep.subr.mxu0 0.0
    %457 = vmatpush1.msra.mxu0 0.0
    %458 = vmatprep.subr.mxu0 0.0
    %459 = vmatpush1.msra.mxu0 0.0
    %460 = vmatprep.subr.mxu0 0.0
    %461 = vmatpush1.msra.mxu0 0.0
    %462 = vmatprep.subr.mxu0 0.0
    %463 = vmatpush1.msra.mxu0 0.0
    %464 = vmatprep.subr.mxu0 0.0
    %465 = vmatpush1.msra.mxu0 0.0
    %466 = vmatprep.subr.mxu0 0.0
    %467 = vmatpush1.msra.mxu0 0.0
    %468 = vmatprep.subr.mxu0 0.0
    %469 = vmatpush1.msra.mxu0 0.0
    %470 = vmatprep.subr.mxu0 0.0
    %471 = vmatpush1.msra.mxu0 0.0
    %472 = vmatprep.mubr.f32.mxu0 0.0
    %473 = vmatmul.mubr.f32.gmra.mrb[0].mxu0 %v335
    %v474 = vpop.f32.mrb[0].mxu0
    %v475 = vadd.f32 %v310, %v474
    %v476 = vpop.f32.mrb[0].mxu0
    %v477 = vadd.f32 %v314, %v476
    %478 = vdwg.mxu0
    %479 = vmatprep.subr.mxu0 %v275
    %480 = vmatpush1.msra.mxu0 %v274
    %481 = vmatprep.subr.mxu0 %v282
    %482 = vmatpush1.msra.mxu0 %v281
    %483 = vmatprep.subr.mxu0 %v289
    %484 = vmatpush1.msra.mxu0 %v288
    %485 = vmatprep.subr.mxu0 %v296
    %486 = vmatpush1.msra.mxu0 %v295
    %487 = vmatprep.subr.mxu0 0.0
    %488 = vmatpush1.msra.mxu0 0.0
    %489 = vmatprep.subr.mxu0 0.0
    %490 = vmatpush1.msra.mxu0 0.0
    %491 = vmatprep.subr.mxu0 0.0
    %492 = vmatpush1.msra.mxu0 0.0
    %493 = vmatprep.subr.mxu0 0.0
    %494 = vmatpush1.msra.mxu0 0.0
    %495 = vmatprep.subr.mxu0 0.0
    %496 = vmatpush1.msra.mxu0 0.0
    %497 = vmatprep.subr.mxu0 0.0
    %498 = vmatpush1.msra.mxu0 0.0
    %499 = vmatprep.subr.mxu0 0.0
    %500 = vmatpush1.msra.mxu0 0.0
    %501 = vmatprep.subr.mxu0 0.0
    %502 = vmatpush1.msra.mxu0 0.0
    %503 = vmatprep.subr.mxu0 0.0
    %504 = vmatpush1.msra.mxu0 0.0
    %505 = vmatprep.subr.mxu0 0.0
    %506 = vmatpush1.msra.mxu0 0.0
    %507 = vmatprep.subr.mxu0 0.0
    %508 = vmatpush1.msra.mxu0 0.0
    %509 = vmatprep.subr.mxu0 0.0
    %510 = vmatpush1.msra.mxu0 0.0
    %511 = vmatprep.subr.mxu0 0.0
    %512 = vmatpush1.msra.mxu0 0.0
    %513 = vmatprep.subr.mxu0 0.0
    %514 = vmatpush1.msra.mxu0 0.0
    %515 = vmatprep.subr.mxu0 0.0
    %516 = vmatpush1.msra.mxu0 0.0
    %517 = vmatprep.subr.mxu0 0.0
    %518 = vmatpush1.msra.mxu0 0.0
    %519 = vmatprep.subr.mxu0 0.0
    %520 = vmatpush1.msra.mxu0 0.0
    %521 = vmatprep.subr.mxu0 0.0
    %522 = vmatpush1.msra.mxu0 0.0
    %523 = vmatprep.subr.mxu0 0.0
    %524 = vmatpush1.msra.mxu0 0.0
    %525 = vmatprep.subr.mxu0 0.0
    %526 = vmatpush1.msra.mxu0 0.0
    %527 = vmatprep.subr.mxu0 0.0
    %528 = vmatpush1.msra.mxu0 0.0
    %529 = vmatprep.subr.mxu0 0.0
    %530 = vmatpush1.msra.mxu0 0.0
    %531 = vmatprep.subr.mxu0 0.0
    %532 = vmatpush1.msra.mxu0 0.0
    %533 = vmatprep.subr.mxu0 0.0
    %534 = vmatpush1.msra.mxu0 0.0
    %535 = vmatprep.subr.mxu0 0.0
    %536 = vmatpush1.msra.mxu0 0.0
    %537 = vmatprep.subr.mxu0 0.0
    %538 = vmatpush1.msra.mxu0 0.0
    %539 = vmatprep.subr.mxu0 0.0
    %540 = vmatpush1.msra.mxu0 0.0
    %541 = vmatprep.subr.mxu0 0.0
    %542 = vmatpush1.msra.mxu0 0.0
    %543 = vmatprep.mubr.f32.mxu0 0.0
    %544 = vmatmul.mubr.f32.gmra.mrb[0].mxu0 %v335
    %v545 = vpop.f32.mrb[0].mxu0
    %v546 = vadd.f32 %v318, %v545
    %v547 = vpop.f32.mrb[0].mxu0
    %v548 = vadd.f32 %v322, %v547
    %549 = vdwg.mxu0
    %550 = vmatprep.subr.mxu0 0.0
    %551 = vmatpush1.msra.mxu0 %v276
    %552 = vmatprep.subr.mxu0 0.0
    %553 = vmatpush1.msra.mxu0 %v283
    %554 = vmatprep.subr.mxu0 0.0
    %555 = vmatpush1.msra.mxu0 %v290
    %556 = vmatprep.subr.mxu0 0.0
    %557 = vmatpush1.msra.mxu0 %v297
    %558 = vmatprep.subr.mxu0 0.0
    %559 = vmatpush1.msra.mxu0 0.0
    %560 = vmatprep.subr.mxu0 0.0
    %561 = vmatpush1.msra.mxu0 0.0
    %562 = vmatprep.subr.mxu0 0.0
    %563 = vmatpush1.msra.mxu0 0.0
    %564 = vmatprep.subr.mxu0 0.0
    %565 = vmatpush1.msra.mxu0 0.0
    %566 = vmatprep.subr.mxu0 0.0
    %567 = vmatpush1.msra.mxu0 0.0
    %568 = vmatprep.subr.mxu0 0.0
    %569 = vmatpush1.msra.mxu0 0.0
    %570 = vmatprep.subr.mxu0 0.0
    %571 = vmatpush1.msra.mxu0 0.0
    %572 = vmatprep.subr.mxu0 0.0
    %573 = vmatpush1.msra.mxu0 0.0
    %574 = vmatprep.subr.mxu0 0.0
    %575 = vmatpush1.msra.mxu0 0.0
    %576 = vmatprep.subr.mxu0 0.0
    %577 = vmatpush1.msra.mxu0 0.0
    %578 = vmatprep.subr.mxu0 0.0
    %579 = vmatpush1.msra.mxu0 0.0
    %580 = vmatprep.subr.mxu0 0.0
    %581 = vmatpush1.msra.mxu0 0.0
    %582 = vmatprep.subr.mxu0 0.0
    %583 = vmatpush1.msra.mxu0 0.0
    %584 = vmatprep.subr.mxu0 0.0
    %585 = vmatpush1.msra.mxu0 0.0
    %586 = vmatprep.subr.mxu0 0.0
    %587 = vmatpush1.msra.mxu0 0.0
    %588 = vmatprep.subr.mxu0 0.0
    %589 = vmatpush1.msra.mxu0 0.0
    %590 = vmatprep.subr.mxu0 0.0
    %591 = vmatpush1.msra.mxu0 0.0
    %592 = vmatprep.subr.mxu0 0.0
    %593 = vmatpush1.msra.mxu0 0.0
    %594 = vmatprep.subr.mxu0 0.0
    %595 = vmatpush1.msra.mxu0 0.0
    %596 = vmatprep.subr.mxu0 0.0
    %597 = vmatpush1.msra.mxu0 0.0
    %598 = vmatprep.subr.mxu0 0.0
    %599 = vmatpush1.msra.mxu0 0.0
    %600 = vmatprep.subr.mxu0 0.0
    %601 = vmatpush1.msra.mxu0 0.0
    %602 = vmatprep.subr.mxu0 0.0
    %603 = vmatpush1.msra.mxu0 0.0
    %604 = vmatprep.subr.mxu0 0.0
    %605 = vmatpush1.msra.mxu0 0.0
    %606 = vmatprep.subr.mxu0 0.0
    %607 = vmatpush1.msra.mxu0 0.0
    %608 = vmatprep.subr.mxu0 0.0
    %609 = vmatpush1.msra.mxu0 0.0
    %610 = vmatprep.subr.mxu0 0.0
    %611 = vmatpush1.msra.mxu0 0.0
    %612 = vmatprep.subr.mxu0 0.0
    %613 = vmatpush1.msra.mxu0 0.0
    %614 = vmatprep.mubr.f32.mxu0 0.0
    %615 = vmatmul.mubr.f32.gmra.mrb[0].mxu0 %v335
    %v616 = vpop.f32.mrb[0].mxu0
    %v617 = vadd.f32 %v326, %v616
    %v618 = vpop.f32.mrb[0].mxu0
    %619 = vdwg.mxu0
    %v620 = vsub.f32 0.0, %v404
    %v621 = vsub.f32 0.0, %v406
    %v622 = vsub.f32 0.0, %v475
    %v623 = vsub.f32 0.0, %v477
    %v624 = vsub.f32 0.0, %v546
    %v625 = vsub.f32 0.0, %v548
    %v626 = vsub.f32 0.0, %v617
    %v627 = vmul.f32 %v620, 1.442695
    %v628 = vpow.pop %v627
    %v629 = vmul.f32 %v621, 1.442695
    %v630 = vpow.pop %v629
    %v631 = vmul.f32 %v622, 1.442695
    %v632 = vpow.pop %v631
    %v633 = vmul.f32 %v623, 1.442695
    %v634 = vpow.pop %v633
    %v635 = vmul.f32 %v624, 1.442695
    %v636 = vpow.pop %v635
    %v637 = vmul.f32 %v625, 1.442695
    %v638 = vpow.pop %v637
    %v639 = vmul.f32 %v626, 1.442695
    %v640 = vpow.pop %v639
    %v641 = vadd.f32 %v628, 1.0
    %v642 = vadd.f32 %v630, 1.0
    %v643 = vadd.f32 %v632, 1.0
    %v644 = vadd.f32 %v634, 1.0
    %v645 = vadd.f32 %v636, 1.0
    %v646 = vadd.f32 %v638, 1.0
    %v647 = vadd.f32 %v640, 1.0
    %v648 = vrcp.pop %v641
    %v649 = vrcp.pop %v642
    %v650 = vrcp.pop %v643
    %v651 = vrcp.pop %v644
    %v652 = vrcp.pop %v645
    %v653 = vrcp.pop %v646
    %v654 = vrcp.pop %v647
    %655 = vst [vmem:[#allocation11] sm:$0xff] %v648
    %656 = vst [vmem:[#allocation11 + $0x8] sm:$0xff] %v649
    %657 = vst [vmem:[#allocation11 + $0x10] sm:$0xff] %v650
    %658 = vst [vmem:[#allocation11 + $0x18] sm:$0xff] %v651
    %659 = vst [vmem:[#allocation11 + $0x20] sm:$0xff] %v652
    %660 = vst [vmem:[#allocation11 + $0x28] sm:$0xff] %v653
    %661 = vst [vmem:[#allocation11 + $0x30] sm:$0xff] %v654
    // Predicated region
    $region42: #{tpu_custom_call.1} parent=1 // pred_check
      _
    $region43: #{tpu_custom_call.1} parent=1 // pred_check_branch
      %663 = sbr.rel (0) target = $region45
    $region44: #{tpu_custom_call.1} parent=1 // pred_region
      %s665 = ssub.s32 896, 896
      %666 = vsyncadd [#allocation4], %s665
      %s668 = sshll.u32 [#allocation11], 4
      %s669 = int_to_ptr.vmem [resolvable:$true] %s668
      %671 = dma.vmem_to_hbm [thread:$0]  %s669, 896, %s5, [#allocation4]
    $region45: #{tpu_custom_call.1} parent=1 // pred_fallthru
      _
    // Predicated region
    $region46: #{tpu_custom_call.1} parent=1 // pred_check
      _
    $region47: #{tpu_custom_call.1} parent=1 // pred_check_branch
      %673 = sbr.rel (0) target = $region49
    $region48: #{tpu_custom_call.1} parent=1 // pred_region
      %674 = dma.done [#allocation4], 896
    $region49: #{tpu_custom_call.1} parent=1 // pred_fallthru
      _
    %675 = vsyncpa [#allocation3], 1
    %676 = vsyncpa [#allocation6], 1
    %677 = vsyncpa [#allocation9], 1
    %678 = vsyncpa [#allocation4], 1

</llo_original>
